<compile_context>
chip_gen: v5e
topology: v5e:2x2
jax: 0.10.0
libtpu: 0.0.40
codegen_flags: <defaults>
</compile_context>

<pallas_src>
import functools
import math
from functools import partial

import jax
import jax.numpy as jnp
from jax import lax
from jax.experimental import pallas as pl
from jax.experimental.pallas import tpu as pltpu


_INV_SQRT2 = 1.0 / math.sqrt(2.0)


# ----------------------------------------------------------------------------
# small helpers
# ----------------------------------------------------------------------------
def _compiler_params(dims, vmem_limit_bytes=None):
    cp = getattr(pltpu, "CompilerParams", None)
    if cp is None:  # pragma: no cover - very old jax
        cp = getattr(pltpu, "TPUCompilerParams", None)
        if cp is None:
            return None
    kwargs = dict(dimension_semantics=dims)
    if vmem_limit_bytes is not None:
        kwargs["vmem_limit_bytes"] = int(vmem_limit_bytes)
    try:
        return cp(**kwargs)
    except TypeError:  # pragma: no cover - vmem_limit_bytes kwarg unsupported
        return cp(dimension_semantics=dims)


def _cost_estimate(flops, transcendentals, bytes_accessed):
    try:
        return pl.CostEstimate(flops=int(flops),
                               transcendentals=int(transcendentals),
                               bytes_accessed=int(bytes_accessed))
    except Exception:  # pragma: no cover - CostEstimate unavailable
        return None


def _row_tile(n, target):
    """Largest row tile <= target that is a multiple of 8 and divides n."""
    if n <= target:
        return n
    t = target - (target % 8)
    while t >= 8:
        if n % t == 0:
            return t
        t -= 8
    return min(n, target)  # ragged tail; Pallas masks the edge block


def _h_chunk(h, target):
    """fc1-output chunk width: multiple of 128 that divides h (else full h)."""
    if h <= target:
        return h
    c = target - (target % 128)
    while c >= 128:
        if h % c == 0:
            return c
        c -= 128
    return h


def _ln(x, gamma, beta, eps):
    """Row-wise LayerNorm in f32 (gamma/beta are (1, C) and broadcast)."""
    mean = jnp.mean(x, axis=-1, keepdims=True)
    xc = x - mean
    var = jnp.mean(xc * xc, axis=-1, keepdims=True)
    return xc * lax.rsqrt(var + eps) * gamma + beta


def _gelu_exact(x):
    """Exact (erf) GELU, matching torch.nn.GELU(approximate='none')."""
    return 0.5 * x * (1.0 + lax.erf(x * _INV_SQRT2))


def _resident_spec(shape, buffered):
    """BlockSpec for a weight/bias block whose index is constant over the grid.

    With buffered=True the block is single-buffered (pl.Buffered(1)), halving
    the VMEM footprint of resident weights (v7x's 64 MiB VMEM budget).
    """
    index_map = lambda *_: (0,) * len(shape)
    if buffered and hasattr(pl, "Buffered"):
        try:
            return pl.BlockSpec(shape, index_map, pipeline_mode=pl.Buffered(1))
        except TypeError:  # pragma: no cover - pipeline_mode kwarg unsupported
            pass
    return pl.BlockSpec(shape, index_map)


@functools.lru_cache(maxsize=None)
def _buffered_residents_supported():
    """Tiny eager probe: does pl.Buffered(1) compile & run on this TPU?"""
    if not hasattr(pl, "Buffered"):
        return False
    try:
        def k(c_ref, x_ref, o_ref):
            o_ref[...] = x_ref[...] + c_ref[...]

        x = jnp.zeros((8, 128), jnp.float32)
        out = pl.pallas_call(
            k,
            out_shape=jax.ShapeDtypeStruct((8, 128), jnp.float32),
            grid=(1,),
            in_specs=[
                pl.BlockSpec((8, 128), lambda i: (0, 0),
                             pipeline_mode=pl.Buffered(1)),
                pl.BlockSpec((8, 128), lambda i: (0, 0)),
            ],
            out_specs=pl.BlockSpec((8, 128), lambda i: (0, 0)),
        )(x, x)
        jax.block_until_ready(out)
        return True
    except Exception:  # pragma: no cover - fall back to default buffering
        return False


@functools.lru_cache(maxsize=None)
def _hw_defaults():
    """Per-TPU-generation tile sizes / VMEM budget (perf-review items)."""
    kind = ""
    try:
        kind = jax.devices()[0].device_kind.lower()
    except Exception:  # pragma: no cover
        pass
    if "v7" in kind:
        # 64 MiB physical VMEM per TC: small row tiles, single-buffer the
        # resident weights, keep the scoped limit well under physical.
        return dict(tile_m=256, tile_n=512, h_chunk=512,
                    vmem_limit=48 * 1024 * 1024,
                    buffered_residents=_buffered_residents_supported())
    if "v6" in kind:
        # 128 MiB physical VMEM: large row tiles (~85% HBM roofline) with an
        # explicitly raised scoped limit instead of the 32 MiB default.
        return dict(tile_m=512, tile_n=1024, h_chunk=1024,
                    vmem_limit=96 * 1024 * 1024, buffered_residents=False)
    if "v5" in kind:
        # 16 MiB default scoped VMEM: moderate tiles + raised limit.
        return dict(tile_m=256, tile_n=512, h_chunk=512,
                    vmem_limit=64 * 1024 * 1024, buffered_residents=False)
    return dict(tile_m=256, tile_n=512, h_chunk=512,
                vmem_limit=None, buffered_residents=False)


# ----------------------------------------------------------------------------
# Kernel 1: patch-embed matmul + bias + pos-embed + LayerNorm(norm1)
# ----------------------------------------------------------------------------
def _patch_embed_kernel(x_ref, w_ref, b_ref, pos_ref, g1_ref, be1_ref, o_ref,
                        *, eps):
    # x_ref: (1, TN, Kp)  w_ref: (Kp, D)  pos_ref: (TN, D)
    # Kp underfills the MXU K depth, but this kernel is memory-bound on the
    # patches; the bias/pos/LN epilogue rides along for free on the VPU/EUP.
    y = jnp.dot(x_ref[0], w_ref[...], preferred_element_type=jnp.float32)
    y = y + b_ref[...] + pos_ref[...]
    o_ref[0] = _ln(y, g1_ref[...], be1_ref[...], eps).astype(o_ref.dtype)


def patch_embed_pos_norm(patches, w, b, pos, gamma1, beta1, *, eps=1e-6,
                         tile_n=512, out_dtype=jnp.bfloat16, vmem_limit=None):
    B, N, Kp = patches.shape
    D = w.shape[1]
    TN = _row_tile(N, tile_n)
    nb = pl.cdiv(N, TN)
    kern = partial(_patch_embed_kernel, eps=eps)
    cost = _cost_estimate(
        flops=2 * B * N * Kp * D,
        transcendentals=B * N,  # one rsqrt per row (LayerNorm)
        bytes_accessed=(patches.size * patches.dtype.itemsize
                        + Kp * D * w.dtype.itemsize + N * D * 4
                        + B * N * D * jnp.dtype(out_dtype).itemsize))
    # Grid order (nb, B): batch is the inner (fastest) axis, so the pos-embed
    # / weight / LN blocks keep a constant block index across it and are
    # fetched once per row tile instead of once per (row tile, batch).
    return pl.pallas_call(
        kern,
        out_shape=jax.ShapeDtypeStruct((B, N, D), out_dtype),
        grid=(nb, B),
        in_specs=[
            pl.BlockSpec((1, TN, Kp), lambda ni, bi: (bi, ni, 0)),
            pl.BlockSpec((Kp, D), lambda ni, bi: (0, 0)),   # resident weight
            pl.BlockSpec((1, D), lambda ni, bi: (0, 0)),    # resident bias
            pl.BlockSpec((TN, D), lambda ni, bi: (ni, 0)),  # pos (no B bcast)
            pl.BlockSpec((1, D), lambda ni, bi: (0, 0)),    # norm1 gamma
            pl.BlockSpec((1, D), lambda ni, bi: (0, 0)),    # norm1 beta
        ],
        out_specs=pl.BlockSpec((1, TN, D), lambda ni, bi: (bi, ni, 0)),
        compiler_params=_compiler_params(("parallel", "parallel"), vmem_limit),
        cost_estimate=cost,
    )(patches, w, b.reshape(1, D), pos, gamma1.reshape(1, D),
      beta1.reshape(1, D))


# ----------------------------------------------------------------------------
# Kernel 2: LN(norm2) -> fc1 + GELU -> fc2 -> (x + x) -> final LN, fused
# ----------------------------------------------------------------------------
def _mlp_block_kernel(x_ref, g2_ref, be2_ref, w1_ref, b1_ref, w2_ref, b2_ref,
                      gn_ref, ben_ref, o_ref, *, eps, res_scale, h_chunk):
    TM = x_ref.shape[0]
    H = w1_ref.shape[1]
    D = w2_ref.shape[1]

    x = x_ref[...].astype(jnp.float32)
    y = _ln(x, g2_ref[...], be2_ref[...], eps)
    yb = y.astype(w1_ref.dtype)

    n_chunks = H // h_chunk
    if n_chunks <= 1:
        h = jnp.dot(yb, w1_ref[...], preferred_element_type=jnp.float32)
        h = _gelu_exact(h + b1_ref[...])
        z = jnp.dot(h.astype(w2_ref.dtype), w2_ref[...],
                    preferred_element_type=jnp.float32)
    else:
        # Chunk the fc1-output (H) dimension so no full (TM, H) f32 GELU
        # intermediate stays live (vreg / scratch pressure, esp. on v7x).
        def body(c, acc):
            off = pl.multiple_of(c * h_chunk, h_chunk)
            hc = jnp.dot(yb, w1_ref[:, pl.ds(off, h_chunk)],
                         preferred_element_type=jnp.float32)
            hc = _gelu_exact(hc + b1_ref[:, pl.ds(off, h_chunk)])
            return acc + jnp.dot(hc.astype(w2_ref.dtype),
                                 w2_ref[pl.ds(off, h_chunk), :],
                                 preferred_element_type=jnp.float32)

        z = lax.fori_loop(0, n_chunks, body, jnp.zeros((TM, D), jnp.float32))
    z = z + b2_ref[...]

    # Reference Block ends with `x = x + drop_path(x)` (identity drop_path),
    # i.e. 2 * mlp_out, followed by the model's final LayerNorm.  Since
    # LN(s*z; eps) == LN(z; eps/s^2) exactly, fold the scale into eps (free).
    eff_eps = eps / (res_scale * res_scale)
    o_ref[...] = _ln(z, gn_ref[...], ben_ref[...], eff_eps).astype(o_ref.dtype)


def mlp_block_fused(x, g2, be2, w1, b1, w2, b2, gn, ben, *, eps=1e-6,
                    res_scale=2.0, tile_m=256, h_chunk_target=512,
                    vmem_limit=None, buffered_residents=False):
    M, D = x.shape
    H = w1.shape[1]
    TM = _row_tile(M, tile_m)
    hc = _h_chunk(H, h_chunk_target)
    kern = partial(_mlp_block_kernel, eps=eps, res_scale=res_scale, h_chunk=hc)
    cost = _cost_estimate(
        flops=4 * M * D * H,                       # fc1 + fc2
        transcendentals=M * H,                     # erf in GELU
        bytes_accessed=(2 * M * D * 4 + 2 * D * H * w1.dtype.itemsize))

    res = lambda shape: _resident_spec(shape, buffered_residents)
    # TODO(synk): for extremely large D the resident (D,H)/(H,D) weights could
    # still exceed VMEM; an in-kernel K-tiling via emit_pipeline would be
    # needed there.
    return pl.pallas_call(
        kern,
        out_shape=jax.ShapeDtypeStruct((M, D), jnp.float32),
        grid=(pl.cdiv(M, TM),),
        in_specs=[
            pl.BlockSpec((TM, D), lambda i: (i, 0)),
            res((1, D)), res((1, D)),              # norm2 gamma/beta
            res((D, H)), res((1, H)),              # fc1 w/b
            res((H, D)), res((1, D)),              # fc2 w/b
            res((1, D)), res((1, D)),              # final norm gamma/beta
        ],
        out_specs=pl.BlockSpec((TM, D), lambda i: (i, 0)),
        compiler_params=_compiler_params(("parallel",), vmem_limit),
        cost_estimate=cost,
    )(x, g2.reshape(1, D), be2.reshape(1, D), w1, b1.reshape(1, H),
      w2, b2.reshape(1, D), gn.reshape(1, D), ben.reshape(1, D))


# ----------------------------------------------------------------------------
# SpectFormer forward (glue in plain JAX/XLA, hot path in Pallas)
# ----------------------------------------------------------------------------
def spectformer_forward(x_img, params, cfg, *, matmul_dtype=jnp.bfloat16):
    hw = _hw_defaults()
    B, Cin, H, W = x_img.shape
    p = cfg["patch_size"]
    D = cfg["embed_dim"]
    Hp, Wp = H // p, W // p
    N = Hp * Wp

    # ---- PatchEmbed: strided conv == patch extraction + matmul -------------
    # TODO(synk): the patch-extraction transpose stays in XLA; an in-kernel
    # gather would need (p, p) blocks that violate the (8,128) tiling rule.
    patches = (
        x_img.reshape(B, Cin, Hp, p, Wp, p)
        .transpose(0, 2, 4, 1, 3, 5)
        .reshape(B, N, Cin * p * p)
    )
    w_proj = params["proj_w"].reshape(D, Cin * p * p).T  # (Cin*p*p, D)

    # patch matmul + bias + pos-embed + LayerNorm(norm1), one kernel.
    # bf16 output: the FFT promotes to complex64 anyway; halves HBM traffic.
    tok_n1 = patch_embed_pos_norm(
        patches.astype(matmul_dtype), w_proj.astype(matmul_dtype),
        params["proj_b"], params["pos_embed"].reshape(N, D),
        params["norm1_g"], params["norm1_b"], eps=1e-6,
        tile_n=hw["tile_n"], out_dtype=jnp.bfloat16,
        vmem_limit=hw["vmem_limit"])                         # (B, N, D) bf16

    # ---- SpectralGatingNetwork ----------------------------------------------
    # TODO(synk): rfft2 / irfft2 have no Pallas TPU primitive, so the spectral
    # transform stays in XLA; the complex gate is a plain XLA multiply that
    # fuses with the FFT epilogue (no extra real/imag HBM round-trips and no
    # extra kernel launch).  A fully fused DFT-as-MXU-matmul kernel is the
    # next step for the small (a, b) grids.
    side = int(math.sqrt(N))
    y4 = tok_n1.astype(jnp.float32).reshape(B, side, side, D)
    yf = jnp.fft.rfft2(y4, axes=(1, 2), norm="ortho")        # (B, side, wf, D)
    cw = params["complex_weight"]                            # (side, wf, D, 2)
    yf = yf * lax.complex(cw[..., 0], cw[..., 1])
    y = jnp.fft.irfft2(yf, s=(side, side), axes=(1, 2), norm="ortho")
    y = y.reshape(B * N, D)

    # ---- norm2 -> fc1 + GELU -> fc2 -> (x + x) -> final norm, fused ---------
    y = mlp_block_fused(
        y, params["norm2_g"], params["norm2_b"],
        params["fc1_w"].T.astype(matmul_dtype), params["fc1_b"],
        params["fc2_w"].T.astype(matmul_dtype), params["fc2_b"],
        params["norm_g"], params["norm_b"], eps=1e-6, res_scale=2.0,
        tile_m=hw["tile_m"], h_chunk_target=hw["h_chunk"],
        vmem_limit=hw["vmem_limit"],
        buffered_residents=hw["buffered_residents"])

    # ---- reshape (B, H, W, -1) -> NCHW permute ------------------------------
    return y.reshape(B, H, W, -1).transpose(0, 3, 1, 2)


# ----------------------------------------------------------------------------
# Deterministic parameter construction (synthetic init, no checkpoint)
# ----------------------------------------------------------------------------
def init_params(key, cfg):
    Cin = cfg["in_chans"]
    D = cfg["embed_dim"]
    p = cfg["patch_size"]
    img = cfg["img_size"]
    hid = int(D * cfg["mlp_ratio"])
    grid = img // p
    N = grid * grid
    wf = grid // 2 + 1

    ks = jax.random.split(key, 6)
    f32 = jnp.float32
    return {
        "proj_w": 0.02 * jax.random.normal(ks[0], (D, Cin, p, p), f32),
        "proj_b": jnp.zeros((D,), f32),
        "pos_embed": 0.02 * jax.random.normal(ks[1], (1, N, D), f32),
        "norm1_g": jnp.ones((D,), f32),
        "norm1_b": jnp.zeros((D,), f32),
        "complex_weight": 0.02 * jax.random.normal(ks[2], (grid, wf, D, 2), f32),
        "norm2_g": jnp.ones((D,), f32),
        "norm2_b": jnp.zeros((D,), f32),
        "fc1_w": 0.02 * jax.random.normal(ks[3], (hid, D), f32),
        "fc1_b": jnp.zeros((hid,), f32),
        "fc2_w": 0.02 * jax.random.normal(ks[4], (D, hid), f32),
        "fc2_b": jnp.zeros((D,), f32),
        "norm_g": jnp.ones((D,), f32),
        "norm_b": jnp.zeros((D,), f32),
    }


if __name__ == "__main__":
    # NOTE: demo shapes are deliberately tiny (D=32 < 128 lanes); for
    # benchmarking, use configs with D and hidden dim as multiples of 128/256.
    cfg = dict(img_size=16, patch_size=4, in_chans=4, embed_dim=32, mlp_ratio=4.0)

    key = jax.random.PRNGKey(0)
    k_param, k_in = jax.random.split(key)
    params = init_params(k_param, cfg)

    B = 2
    x = jax.random.normal(
        k_in, (B, cfg["in_chans"], cfg["img_size"], cfg["img_size"]), jnp.float32)

    _hw_defaults()  # run the (cached) hardware probe outside of jit tracing

    fwd = jax.jit(lambda xi, pp: spectformer_forward(xi, pp, cfg))
    out = jax.block_until_ready(fwd(x, params))

    # forward_features reshapes (B, N, D) -> (B, H, W, D*N/(H*W)) -> NCHW permute
    expected_chans = cfg["embed_dim"] // (cfg["patch_size"] ** 2)
    assert out.shape == (B, expected_chans, cfg["img_size"], cfg["img_size"]), out.shape
    assert bool(jnp.all(jnp.isfinite(out)))
    print("KERNEL_OK")
</pallas_src>

<mosaic_0001>
module attributes {stable_mosaic.version = 11 : i64} {
  func.func @_patch_embed_kernel(%arg0: i32, %arg1: i32, %arg2: memref<1x16x64xbf16, #tpu.memory_space<vmem>>, %arg3: memref<64x32xbf16, #tpu.memory_space<vmem>>, %arg4: memref<1x32xf32, #tpu.memory_space<vmem>>, %arg5: memref<16x32xf32, #tpu.memory_space<vmem>>, %arg6: memref<1x32xf32, #tpu.memory_space<vmem>>, %arg7: memref<1x32xf32, #tpu.memory_space<vmem>>, %arg8: memref<1x16x32xbf16, #tpu.memory_space<vmem>>) attributes {dimension_semantics = [#tpu.dimension_semantics<parallel>, #tpu.dimension_semantics<parallel>], iteration_bounds = array<i64: 1, 2>, scalar_prefetch = 0 : i64, scratch_operands = 0 : i64, tpu.core_type = #tpu.core_type<tc>, window_params = [{transform_indices = @transform_0, window_bounds = array<i64: 1, 16, 64>}, {pipeline_mode = #tpu.pipeline_mode<synchronous>, transform_indices = @transform_1, window_bounds = array<i64: 64, 32>}, {pipeline_mode = #tpu.pipeline_mode<synchronous>, transform_indices = @transform_2, window_bounds = array<i64: 1, 32>}, {transform_indices = @transform_3, window_bounds = array<i64: 16, 32>}, {pipeline_mode = #tpu.pipeline_mode<synchronous>, transform_indices = @transform_4, window_bounds = array<i64: 1, 32>}, {pipeline_mode = #tpu.pipeline_mode<synchronous>, transform_indices = @transform_5, window_bounds = array<i64: 1, 32>}, {transform_indices = @transform_6, window_bounds = array<i64: 1, 16, 32>}]} {
    %c0 = arith.constant 0 : index
    %c0_0 = arith.constant 0 : index
    %c0_1 = arith.constant 0 : index
    %0 = vector.load %arg2[%c0, %c0_0, %c0_1] : memref<1x16x64xbf16, #tpu.memory_space<vmem>>, vector<1x16x64xbf16>
    %1 = vector.shape_cast %0 : vector<1x16x64xbf16> to vector<16x64xbf16>
    %c0_2 = arith.constant 0 : index
    %c0_3 = arith.constant 0 : index
    %2 = vector.load %arg3[%c0_2, %c0_3] : memref<64x32xbf16, #tpu.memory_space<vmem>>, vector<64x32xbf16>
    %cst = arith.constant dense<0.000000e+00> : vector<16x32xf32>
    %3 = tpu.matmul %1, %2, %cst {dimension_numbers = #tpu.dot_dimension_numbers<[1], [0], [0], [1], [0, 0, 1, 1], [], []>} : vector<16x64xbf16>, vector<64x32xbf16>, vector<16x32xf32> -> vector<16x32xf32>
    %c0_4 = arith.constant 0 : index
    %c0_5 = arith.constant 0 : index
    %4 = vector.load %arg4[%c0_4, %c0_5] : memref<1x32xf32, #tpu.memory_space<vmem>>, vector<1x32xf32>
    %5 = vector.broadcast %4 : vector<1x32xf32> to vector<16x32xf32>
    %6 = arith.addf %3, %5 : vector<16x32xf32>
    %c0_6 = arith.constant 0 : index
    %c0_7 = arith.constant 0 : index
    %7 = vector.load %arg5[%c0_6, %c0_7] : memref<16x32xf32, #tpu.memory_space<vmem>>, vector<16x32xf32>
    %8 = arith.addf %6, %7 : vector<16x32xf32>
    %c0_8 = arith.constant 0 : index
    %c0_9 = arith.constant 0 : index
    %9 = vector.load %arg6[%c0_8, %c0_9] : memref<1x32xf32, #tpu.memory_space<vmem>>, vector<1x32xf32>
    %c0_10 = arith.constant 0 : index
    %c0_11 = arith.constant 0 : index
    %10 = vector.load %arg7[%c0_10, %c0_11] : memref<1x32xf32, #tpu.memory_space<vmem>>, vector<1x32xf32>
    %cst_12 = arith.constant dense<0.000000e+00> : vector<16xf32>
    %11 = vector.multi_reduction <add>, %8, %cst_12 [1] : vector<16x32xf32> to vector<16xf32>
    %12 = vector.shape_cast %11 : vector<16xf32> to vector<16x1xf32>
    %cst_13 = arith.constant 3.200000e+01 : f32
    %13 = vector.broadcast %cst_13 : f32 to vector<16x1xf32>
    %14 = arith.divf %12, %13 : vector<16x1xf32>
    %15 = vector.broadcast %14 : vector<16x1xf32> to vector<16x32xf32>
    %16 = arith.subf %8, %15 : vector<16x32xf32>
    %17 = arith.mulf %16, %16 : vector<16x32xf32>
    %cst_14 = arith.constant dense<0.000000e+00> : vector<16xf32>
    %18 = vector.multi_reduction <add>, %17, %cst_14 [1] : vector<16x32xf32> to vector<16xf32>
    %19 = vector.shape_cast %18 : vector<16xf32> to vector<16x1xf32>
    %cst_15 = arith.constant 3.200000e+01 : f32
    %20 = vector.broadcast %cst_15 : f32 to vector<16x1xf32>
    %21 = arith.divf %19, %20 : vector<16x1xf32>
    %cst_16 = arith.constant 9.99999997E-7 : f32
    %22 = vector.broadcast %cst_16 : f32 to vector<16x1xf32>
    %23 = arith.addf %21, %22 : vector<16x1xf32>
    %24 = math.rsqrt %23 : vector<16x1xf32>
    %25 = vector.broadcast %24 : vector<16x1xf32> to vector<16x32xf32>
    %26 = arith.mulf %16, %25 : vector<16x32xf32>
    %27 = vector.broadcast %9 : vector<1x32xf32> to vector<16x32xf32>
    %28 = arith.mulf %26, %27 : vector<16x32xf32>
    %29 = vector.broadcast %10 : vector<1x32xf32> to vector<16x32xf32>
    %30 = arith.addf %28, %29 : vector<16x32xf32>
    %31 = arith.truncf %30 : vector<16x32xf32> to vector<16x32xbf16>
    %c0_17 = arith.constant 0 : index
    %c0_18 = arith.constant 0 : index
    %c0_19 = arith.constant 0 : index
    %32 = vector.load %arg8[%c0_17, %c0_18, %c0_19] : memref<1x16x32xbf16, #tpu.memory_space<vmem>>, vector<1x16x32xbf16>
    %33 = vector.shape_cast %32 : vector<1x16x32xbf16> to vector<16x32xbf16>
    %34 = vector.shape_cast %31 : vector<16x32xbf16> to vector<1x16x32xbf16>
    tpu.vector_store %arg8[%c0_17, %c0_18, %c0_19], %34 {strides = array<i32>} : memref<1x16x32xbf16, #tpu.memory_space<vmem>>, vector<1x16x32xbf16>,
    return
  }
  func.func @transform_0(%arg0: i32, %arg1: i32) -> (i32, i32, i32) {
    %c0_i32 = arith.constant 0 : i32
    %c0_i32_0 = arith.constant 0 : i32
    return %arg1, %arg0, %c0_i32 : i32, i32, i32
  }
  func.func @transform_1(%arg0: i32, %arg1: i32) -> (i32, i32) {
    %c0_i32 = arith.constant 0 : i32
    %c0_i32_0 = arith.constant 0 : i32
    %c0_i32_1 = arith.constant 0 : i32
    return %c0_i32, %c0_i32_0 : i32, i32
  }
  func.func @transform_2(%arg0: i32, %arg1: i32) -> (i32, i32) {
    %c0_i32 = arith.constant 0 : i32
    %c0_i32_0 = arith.constant 0 : i32
    %c0_i32_1 = arith.constant 0 : i32
    return %c0_i32, %c0_i32_0 : i32, i32
  }
  func.func @transform_3(%arg0: i32, %arg1: i32) -> (i32, i32) {
    %c0_i32 = arith.constant 0 : i32
    %c0_i32_0 = arith.constant 0 : i32
    return %arg0, %c0_i32 : i32, i32
  }
  func.func @transform_4(%arg0: i32, %arg1: i32) -> (i32, i32) {
    %c0_i32 = arith.constant 0 : i32
    %c0_i32_0 = arith.constant 0 : i32
    %c0_i32_1 = arith.constant 0 : i32
    return %c0_i32, %c0_i32_0 : i32, i32
  }
  func.func @transform_5(%arg0: i32, %arg1: i32) -> (i32, i32) {
    %c0_i32 = arith.constant 0 : i32
    %c0_i32_0 = arith.constant 0 : i32
    %c0_i32_1 = arith.constant 0 : i32
    return %c0_i32, %c0_i32_0 : i32, i32
  }
  func.func @transform_6(%arg0: i32, %arg1: i32) -> (i32, i32, i32) {
    %c0_i32 = arith.constant 0 : i32
    %c0_i32_0 = arith.constant 0 : i32
    return %arg1, %arg0, %c0_i32 : i32, i32, i32
  }
}

module attributes {stable_mosaic.version = 11 : i64} {
  func.func @_mlp_block_kernel(%arg0: i32, %arg1: memref<32x32xf32, #tpu.memory_space<vmem>>, %arg2: memref<1x32xf32, #tpu.memory_space<vmem>>, %arg3: memref<1x32xf32, #tpu.memory_space<vmem>>, %arg4: memref<32x128xbf16, #tpu.memory_space<vmem>>, %arg5: memref<1x128xf32, #tpu.memory_space<vmem>>, %arg6: memref<128x32xbf16, #tpu.memory_space<vmem>>, %arg7: memref<1x32xf32, #tpu.memory_space<vmem>>, %arg8: memref<1x32xf32, #tpu.memory_space<vmem>>, %arg9: memref<1x32xf32, #tpu.memory_space<vmem>>, %arg10: memref<32x32xf32, #tpu.memory_space<vmem>>) attributes {dimension_semantics = [#tpu.dimension_semantics<parallel>], iteration_bounds = array<i64: 1>, scalar_prefetch = 0 : i64, scratch_operands = 0 : i64, tpu.core_type = #tpu.core_type<tc>, window_params = [{transform_indices = @transform_0, window_bounds = array<i64: 32, 32>}, {pipeline_mode = #tpu.pipeline_mode<synchronous>, transform_indices = @transform_1, window_bounds = array<i64: 1, 32>}, {pipeline_mode = #tpu.pipeline_mode<synchronous>, transform_indices = @transform_2, window_bounds = array<i64: 1, 32>}, {pipeline_mode = #tpu.pipeline_mode<synchronous>, transform_indices = @transform_3, window_bounds = array<i64: 32, 128>}, {pipeline_mode = #tpu.pipeline_mode<synchronous>, transform_indices = @transform_4, window_bounds = array<i64: 1, 128>}, {pipeline_mode = #tpu.pipeline_mode<synchronous>, transform_indices = @transform_5, window_bounds = array<i64: 128, 32>}, {pipeline_mode = #tpu.pipeline_mode<synchronous>, transform_indices = @transform_6, window_bounds = array<i64: 1, 32>}, {pipeline_mode = #tpu.pipeline_mode<synchronous>, transform_indices = @transform_7, window_bounds = array<i64: 1, 32>}, {pipeline_mode = #tpu.pipeline_mode<synchronous>, transform_indices = @transform_8, window_bounds = array<i64: 1, 32>}, {transform_indices = @transform_9, window_bounds = array<i64: 32, 32>}]} {
    %c0 = arith.constant 0 : index
    %c0_0 = arith.constant 0 : index
    %0 = vector.load %arg1[%c0, %c0_0] : memref<32x32xf32, #tpu.memory_space<vmem>>, vector<32x32xf32>
    %c0_1 = arith.constant 0 : index
    %c0_2 = arith.constant 0 : index
    %1 = vector.load %arg2[%c0_1, %c0_2] : memref<1x32xf32, #tpu.memory_space<vmem>>, vector<1x32xf32>
    %c0_3 = arith.constant 0 : index
    %c0_4 = arith.constant 0 : index
    %2 = vector.load %arg3[%c0_3, %c0_4] : memref<1x32xf32, #tpu.memory_space<vmem>>, vector<1x32xf32>
    %cst = arith.constant dense<0.000000e+00> : vector<32xf32>
    %3 = vector.multi_reduction <add>, %0, %cst [1] : vector<32x32xf32> to vector<32xf32>
    %4 = vector.shape_cast %3 : vector<32xf32> to vector<32x1xf32>
    %cst_5 = arith.constant 3.200000e+01 : f32
    %5 = vector.broadcast %cst_5 : f32 to vector<32x1xf32>
    %6 = arith.divf %4, %5 : vector<32x1xf32>
    %7 = vector.broadcast %6 : vector<32x1xf32> to vector<32x32xf32>
    %8 = arith.subf %0, %7 : vector<32x32xf32>
    %9 = arith.mulf %8, %8 : vector<32x32xf32>
    %cst_6 = arith.constant dense<0.000000e+00> : vector<32xf32>
    %10 = vector.multi_reduction <add>, %9, %cst_6 [1] : vector<32x32xf32> to vector<32xf32>
    %11 = vector.shape_cast %10 : vector<32xf32> to vector<32x1xf32>
    %cst_7 = arith.constant 3.200000e+01 : f32
    %12 = vector.broadcast %cst_7 : f32 to vector<32x1xf32>
    %13 = arith.divf %11, %12 : vector<32x1xf32>
    %cst_8 = arith.constant 9.99999997E-7 : f32
    %14 = vector.broadcast %cst_8 : f32 to vector<32x1xf32>
    %15 = arith.addf %13, %14 : vector<32x1xf32>
    %16 = math.rsqrt %15 : vector<32x1xf32>
    %17 = vector.broadcast %16 : vector<32x1xf32> to vector<32x32xf32>
    %18 = arith.mulf %8, %17 : vector<32x32xf32>
    %19 = vector.broadcast %1 : vector<1x32xf32> to vector<32x32xf32>
    %20 = arith.mulf %18, %19 : vector<32x32xf32>
    %21 = vector.broadcast %2 : vector<1x32xf32> to vector<32x32xf32>
    %22 = arith.addf %20, %21 : vector<32x32xf32>
    %23 = arith.truncf %22 : vector<32x32xf32> to vector<32x32xbf16>
    %c0_9 = arith.constant 0 : index
    %c0_10 = arith.constant 0 : index
    %24 = vector.load %arg4[%c0_9, %c0_10] : memref<32x128xbf16, #tpu.memory_space<vmem>>, vector<32x128xbf16>
    %cst_11 = arith.constant dense<0.000000e+00> : vector<32x128xf32>
    %25 = tpu.matmul %23, %24, %cst_11 {dimension_numbers = #tpu.dot_dimension_numbers<[1], [0], [0], [1], [0, 0, 1, 1], [], []>} : vector<32x32xbf16>, vector<32x128xbf16>, vector<32x128xf32> -> vector<32x128xf32>
    %c0_12 = arith.constant 0 : index
    %c0_13 = arith.constant 0 : index
    %26 = vector.load %arg5[%c0_12, %c0_13] : memref<1x128xf32, #tpu.memory_space<vmem>>, vector<1x128xf32>
    %27 = vector.broadcast %26 : vector<1x128xf32> to vector<32x128xf32>
    %28 = arith.addf %25, %27 : vector<32x128xf32>
    %cst_14 = arith.constant 5.000000e-01 : f32
    %29 = vector.broadcast %cst_14 : f32 to vector<32x128xf32>
    %30 = arith.mulf %29, %28 : vector<32x128xf32>
    %cst_15 = arith.constant 0.707106769 : f32
    %31 = vector.broadcast %cst_15 : f32 to vector<32x128xf32>
    %32 = arith.mulf %28, %31 : vector<32x128xf32>
    %33 = math.erf %32 : vector<32x128xf32>
    %cst_16 = arith.constant 1.000000e+00 : f32
    %34 = vector.broadcast %cst_16 : f32 to vector<32x128xf32>
    %35 = arith.addf %34, %33 : vector<32x128xf32>
    %36 = arith.mulf %30, %35 : vector<32x128xf32>
    %37 = arith.truncf %36 : vector<32x128xf32> to vector<32x128xbf16>
    %c0_17 = arith.constant 0 : index
    %c0_18 = arith.constant 0 : index
    %38 = vector.load %arg6[%c0_17, %c0_18] : memref<128x32xbf16, #tpu.memory_space<vmem>>, vector<128x32xbf16>
    %cst_19 = arith.constant dense<0.000000e+00> : vector<32x32xf32>
    %39 = tpu.matmul %37, %38, %cst_19 {dimension_numbers = #tpu.dot_dimension_numbers<[1], [0], [0], [1], [0, 0, 1, 1], [], []>} : vector<32x128xbf16>, vector<128x32xbf16>, vector<32x32xf32> -> vector<32x32xf32>
    %c0_20 = arith.constant 0 : index
    %c0_21 = arith.constant 0 : index
    %40 = vector.load %arg7[%c0_20, %c0_21] : memref<1x32xf32, #tpu.memory_space<vmem>>, vector<1x32xf32>
    %41 = vector.broadcast %40 : vector<1x32xf32> to vector<32x32xf32>
    %42 = arith.addf %39, %41 : vector<32x32xf32>
    %c0_22 = arith.constant 0 : index
    %c0_23 = arith.constant 0 : index
    %43 = vector.load %arg8[%c0_22, %c0_23] : memref<1x32xf32, #tpu.memory_space<vmem>>, vector<1x32xf32>
    %c0_24 = arith.constant 0 : index
    %c0_25 = arith.constant 0 : index
    %44 = vector.load %arg9[%c0_24, %c0_25] : memref<1x32xf32, #tpu.memory_space<vmem>>, vector<1x32xf32>
    %cst_26 = arith.constant dense<0.000000e+00> : vector<32xf32>
    %45 = vector.multi_reduction <add>, %42, %cst_26 [1] : vector<32x32xf32> to vector<32xf32>
    %46 = vector.shape_cast %45 : vector<32xf32> to vector<32x1xf32>
    %cst_27 = arith.constant 3.200000e+01 : f32
    %47 = vector.broadcast %cst_27 : f32 to vector<32x1xf32>
    %48 = arith.divf %46, %47 : vector<32x1xf32>
    %49 = vector.broadcast %48 : vector<32x1xf32> to vector<32x32xf32>
    %50 = arith.subf %42, %49 : vector<32x32xf32>
    %51 = arith.mulf %50, %50 : vector<32x32xf32>
    %cst_28 = arith.constant dense<0.000000e+00> : vector<32xf32>
    %52 = vector.multi_reduction <add>, %51, %cst_28 [1] : vector<32x32xf32> to vector<32xf32>
    %53 = vector.shape_cast %52 : vector<32xf32> to vector<32x1xf32>
    %cst_29 = arith.constant 3.200000e+01 : f32
    %54 = vector.broadcast %cst_29 : f32 to vector<32x1xf32>
    %55 = arith.divf %53, %54 : vector<32x1xf32>
    %cst_30 = arith.constant 2.500000e-07 : f32
    %56 = vector.broadcast %cst_30 : f32 to vector<32x1xf32>
    %57 = arith.addf %55, %56 : vector<32x1xf32>
    %58 = math.rsqrt %57 : vector<32x1xf32>
    %59 = vector.broadcast %58 : vector<32x1xf32> to vector<32x32xf32>
    %60 = arith.mulf %50, %59 : vector<32x32xf32>
    %61 = vector.broadcast %43 : vector<1x32xf32> to vector<32x32xf32>
    %62 = arith.mulf %60, %61 : vector<32x32xf32>
    %63 = vector.broadcast %44 : vector<1x32xf32> to vector<32x32xf32>
    %64 = arith.addf %62, %63 : vector<32x32xf32>
    %c0_31 = arith.constant 0 : index
    %c0_32 = arith.constant 0 : index
    %65 = vector.load %arg10[%c0_31, %c0_32] : memref<32x32xf32, #tpu.memory_space<vmem>>, vector<32x32xf32>
    tpu.vector_store %arg10[%c0_31, %c0_32], %64 {strides = array<i32>} : memref<32x32xf32, #tpu.memory_space<vmem>>, vector<32x32xf32>,
    return
  }
  func.func @transform_0(%arg0: i32) -> (i32, i32) {
    %c0_i32 = arith.constant 0 : i32
    %c0_i32_0 = arith.constant 0 : i32
    return %arg0, %c0_i32 : i32, i32
  }
  func.func @transform_1(%arg0: i32) -> (i32, i32) {
    %c0_i32 = arith.constant 0 : i32
    %c0_i32_0 = arith.constant 0 : i32
    %c0_i32_1 = arith.constant 0 : i32
    return %c0_i32, %c0_i32_0 : i32, i32
  }
  func.func @transform_2(%arg0: i32) -> (i32, i32) {
    %c0_i32 = arith.constant 0 : i32
    %c0_i32_0 = arith.constant 0 : i32
    %c0_i32_1 = arith.constant 0 : i32
    return %c0_i32, %c0_i32_0 : i32, i32
  }
  func.func @transform_3(%arg0: i32) -> (i32, i32) {
    %c0_i32 = arith.constant 0 : i32
    %c0_i32_0 = arith.constant 0 : i32
    %c0_i32_1 = arith.constant 0 : i32
    return %c0_i32, %c0_i32_0 : i32, i32
  }
  func.func @transform_4(%arg0: i32) -> (i32, i32) {
    %c0_i32 = arith.constant 0 : i32
    %c0_i32_0 = arith.constant 0 : i32
    %c0_i32_1 = arith.constant 0 : i32
    return %c0_i32, %c0_i32_0 : i32, i32
  }
  func.func @transform_5(%arg0: i32) -> (i32, i32) {
    %c0_i32 = arith.constant 0 : i32
    %c0_i32_0 = arith.constant 0 : i32
    %c0_i32_1 = arith.constant 0 : i32
    return %c0_i32, %c0_i32_0 : i32, i32
  }
  func.func @transform_6(%arg0: i32) -> (i32, i32) {
    %c0_i32 = arith.constant 0 : i32
    %c0_i32_0 = arith.constant 0 : i32
    %c0_i32_1 = arith.constant 0 : i32
    return %c0_i32, %c0_i32_0 : i32, i32
  }
  func.func @transform_7(%arg0: i32) -> (i32, i32) {
    %c0_i32 = arith.constant 0 : i32
    %c0_i32_0 = arith.constant 0 : i32
    %c0_i32_1 = arith.constant 0 : i32
    return %c0_i32, %c0_i32_0 : i32, i32
  }
  func.func @transform_8(%arg0: i32) -> (i32, i32) {
    %c0_i32 = arith.constant 0 : i32
    %c0_i32_0 = arith.constant 0 : i32
    %c0_i32_1 = arith.constant 0 : i32
    return %c0_i32, %c0_i32_0 : i32, i32
  }
  func.func @transform_9(%arg0: i32) -> (i32, i32) {
    %c0_i32 = arith.constant 0 : i32
    %c0_i32_0 = arith.constant 0 : i32
    return %arg0, %c0_i32 : i32, i32
  }
}

</mosaic_0001>

<llo_original>
// kernel: _lambda_.2
$region0: #{_lambda_.2}
  #allocation0 [shape = 'u32[]', space=smem, size = 0x4, offset = 0x4, fixed_abs, tag = 'smem constant byte address 0x4 - core index']
  #allocation1 [shape = 'u32[72,128]{1,0:T(1,128)}', space=vmem, size = 0x9000, scoped, tag = 'internal scratch']
  %s0 = inlined_call_operand.vmem [shape: bf16[2,16,64], index: 0, kind: input, shape index: {}]
  %s1 = inlined_call_operand.vmem [shape: bf16[64,32], index: 1, kind: input, shape index: {}]
  %s2 = inlined_call_operand.vmem [shape: f32[1,32], index: 2, kind: input, shape index: {}]
  %s3 = inlined_call_operand.vmem [shape: f32[16,32], index: 3, kind: input, shape index: {}]
  %s4 = inlined_call_operand.vmem [shape: f32[1,32], index: 4, kind: input, shape index: {}]
  %s5 = inlined_call_operand.vmem [shape: f32[1,32], index: 5, kind: input, shape index: {}]
  %s6 = inlined_call_operand.vmem [shape: bf16[2,16,32], index: 6, kind: output, shape index: {}]
  %s7 = sld [smem:[#allocation0]]
  $region57: #{_lambda_.2} parent=0
    _
  %s9 = ssub.s32 1, %s7
  %s10 = scalar_select 0, %s9, %s7
  loop: start=0, step=1, limit=4
  $region2: #{_lambda_.2} parent=0 // loop_pre_header
    _
  $region3: #{_lambda_.2} parent=0 // loop_header
    %s12 = sphi 0, %s16
    %p13 = scmp.ge.s32.totalorder %s12, 4
    %s19 = sphi 0, %s31
    %s20 = sphi 0, %s27
    %s21 = sphi 0, %s19
    %s22 = sphi 0, %s20
    %s23 = sphi 0, %s21
    %s24 = sphi 0, %s22
    %s36 = sphi 0, %s38
    %s39 = sphi 0, %s36
    %s40 = sphi 0, %s39
    %s56 = sphi 0, %s40
    %s60 = sphi 0, %s60
    %s62 = sphi 0, %s60
    %s63 = sphi 0, %s62
    %s77 = sphi 0, %s63
    %s81 = sphi 0, %s81
    %s83 = sphi 0, %s81
    %s84 = sphi 0, %s83
    %s98 = sphi 0, %s84
    %s104 = sphi 0, %s106
    %s107 = sphi 0, %s104
    %s108 = sphi 0, %s107
    %s124 = sphi 0, %s108
    %s128 = sphi 0, %s128
    %s130 = sphi 0, %s128
    %s131 = sphi 0, %s130
    %s145 = sphi 0, %s131
    %s149 = sphi 0, %s149
    %s151 = sphi 0, %s149
    %s152 = sphi 0, %s151
    %s166 = sphi 0, %s152
    %s174 = sphi 0, %s176
    %s177 = sphi 0, %s174
    %s178 = sphi 0, %s177
    %s194 = sphi 0, %s178
  $region4: #{_lambda_.2} parent=0 // loop_header_branch
    %15 = sbr.rel (%p13) target = $region8
  $region5: #{_lambda_.2} parent=0 // loop_body
    %s17 = ssub.s32 %s12, 1
    %s18 = ssub.s32 %s12, 2
    %s25 = sadd.s32 1, %s20
    %p26 = scmp.ge.s32.totalorder %s25, 2
    %s27 = scalar_select %p26, 0, %s25
    %s28 = sadd.s32 1, %s19
    %s29 = scalar_select %p26, %s28, %s19
    %p30 = scmp.ge.s32.totalorder %s29, 1
    %s31 = scalar_select %p30, 0, %s29
    %s32 = ssub.s32 %s20, %s27
    %s33 = ssub.s32 %s19, %s31
    %s34 = sor.u32 %s32, %s33
    %p35 = scmp.eq.s32.totalorder %s34, 0
    %s37 = sadd.s32 %s36, 1
    %s38 = scalar_select %p35, %s36, %s37
    %p41 = pneg %p35
    %p42 = scmp.eq.s32.totalorder %s12, 1
    %p43 = por %p41, %p42
    %p44 = scmp.ne.s32.totalorder %s36, %s39
    %p45 = scmp.eq.s32.totalorder %s12, 0
    %p46 = por %p44, %p45
    %p47 = scmp.ne.s32.totalorder %s36, %s39
    %p48 = scmp.eq.s32.totalorder %s17, 1
    %p49 = por %p47, %p48
    %p50 = scmp.ne.s32.totalorder %s39, %s40
    %p51 = scmp.eq.s32.totalorder %s17, 0
    %p52 = por %p50, %p51
    %p53 = scmp.ne.s32.totalorder %s39, %s40
    %p54 = scmp.eq.s32.totalorder %s18, 1
    %p55 = por %p53, %p54
    %p57 = scmp.ne.s32.totalorder %s40, %s56
    %p58 = scmp.eq.s32.totalorder %s18, 0
    %p59 = por %p57, %p58
    %s61 = sadd.s32 %s60, 1
    %p64 = scmp.eq.s32.totalorder %s12, 1
    %p65 = scmp.ne.s32.totalorder %s60, %s62
    %p66 = scmp.eq.s32.totalorder %s12, 0
    %p67 = por %p65, %p66
    %p68 = scmp.ne.s32.totalorder %s60, %s62
    %p69 = scmp.eq.s32.totalorder %s17, 1
    %p70 = por %p68, %p69
    %p71 = scmp.ne.s32.totalorder %s62, %s63
    %p72 = scmp.eq.s32.totalorder %s17, 0
    %p73 = por %p71, %p72
    %p74 = scmp.ne.s32.totalorder %s62, %s63
    %p75 = scmp.eq.s32.totalorder %s18, 1
    %p76 = por %p74, %p75
    %p78 = scmp.ne.s32.totalorder %s63, %s77
    %p79 = scmp.eq.s32.totalorder %s18, 0
    %p80 = por %p78, %p79
    %s82 = sadd.s32 %s81, 1
    %p85 = scmp.eq.s32.totalorder %s12, 1
    %p86 = scmp.ne.s32.totalorder %s81, %s83
    %p87 = scmp.eq.s32.totalorder %s12, 0
    %p88 = por %p86, %p87
    %p89 = scmp.ne.s32.totalorder %s81, %s83
    %p90 = scmp.eq.s32.totalorder %s17, 1
    %p91 = por %p89, %p90
    %p92 = scmp.ne.s32.totalorder %s83, %s84
    %p93 = scmp.eq.s32.totalorder %s17, 0
    %p94 = por %p92, %p93
    %p95 = scmp.ne.s32.totalorder %s83, %s84
    %p96 = scmp.eq.s32.totalorder %s18, 1
    %p97 = por %p95, %p96
    %p99 = scmp.ne.s32.totalorder %s84, %s98
    %p100 = scmp.eq.s32.totalorder %s18, 0
    %p101 = por %p99, %p100
    %s102 = ssub.s32 %s19, %s31
    %p103 = scmp.eq.s32.totalorder %s102, 0
    %s105 = sadd.s32 %s104, 1
    %s106 = scalar_select %p103, %s104, %s105
    %p109 = pneg %p103
    %p110 = scmp.eq.s32.totalorder %s12, 1
    %p111 = por %p109, %p110
    %p112 = scmp.ne.s32.totalorder %s104, %s107
    %p113 = scmp.eq.s32.totalorder %s12, 0
    %p114 = por %p112, %p113
    %p115 = scmp.ne.s32.totalorder %s104, %s107
    %p116 = scmp.eq.s32.totalorder %s17, 1
    %p117 = por %p115, %p116
    %p118 = scmp.ne.s32.totalorder %s107, %s108
    %p119 = scmp.eq.s32.totalorder %s17, 0
    %p120 = por %p118, %p119
    %p121 = scmp.ne.s32.totalorder %s107, %s108
    %p122 = scmp.eq.s32.totalorder %s18, 1
    %p123 = por %p121, %p122
    %p125 = scmp.ne.s32.totalorder %s108, %s124
    %p126 = scmp.eq.s32.totalorder %s18, 0
    %p127 = por %p125, %p126
    %s129 = sadd.s32 %s128, 1
    %p132 = scmp.eq.s32.totalorder %s12, 1
    %p133 = scmp.ne.s32.totalorder %s128, %s130
    %p134 = scmp.eq.s32.totalorder %s12, 0
    %p135 = por %p133, %p134
    %p136 = scmp.ne.s32.totalorder %s128, %s130
    %p137 = scmp.eq.s32.totalorder %s17, 1
    %p138 = por %p136, %p137
    %p139 = scmp.ne.s32.totalorder %s130, %s131
    %p140 = scmp.eq.s32.totalorder %s17, 0
    %p141 = por %p139, %p140
    %p142 = scmp.ne.s32.totalorder %s130, %s131
    %p143 = scmp.eq.s32.totalorder %s18, 1
    %p144 = por %p142, %p143
    %p146 = scmp.ne.s32.totalorder %s131, %s145
    %p147 = scmp.eq.s32.totalorder %s18, 0
    %p148 = por %p146, %p147
    %s150 = sadd.s32 %s149, 1
    %p153 = scmp.eq.s32.totalorder %s12, 1
    %p154 = scmp.ne.s32.totalorder %s149, %s151
    %p155 = scmp.eq.s32.totalorder %s12, 0
    %p156 = por %p154, %p155
    %p157 = scmp.ne.s32.totalorder %s149, %s151
    %p158 = scmp.eq.s32.totalorder %s17, 1
    %p159 = por %p157, %p158
    %p160 = scmp.ne.s32.totalorder %s151, %s152
    %p161 = scmp.eq.s32.totalorder %s17, 0
    %p162 = por %p160, %p161
    %p163 = scmp.ne.s32.totalorder %s151, %s152
    %p164 = scmp.eq.s32.totalorder %s18, 1
    %p165 = por %p163, %p164
    %p167 = scmp.ne.s32.totalorder %s152, %s166
    %p168 = scmp.eq.s32.totalorder %s18, 0
    %p169 = por %p167, %p168
    %s170 = ssub.s32 %s20, %s27
    %s171 = ssub.s32 %s19, %s31
    %s172 = sor.u32 %s170, %s171
    %p173 = scmp.eq.s32.totalorder %s172, 0
    %s175 = sadd.s32 %s174, 1
    %s176 = scalar_select %p173, %s174, %s175
    %p179 = pneg %p173
    %p180 = scmp.eq.s32.totalorder %s12, 1
    %p181 = por %p179, %p180
    %p182 = scmp.ne.s32.totalorder %s174, %s177
    %p183 = scmp.eq.s32.totalorder %s12, 0
    %p184 = por %p182, %p183
    %p185 = scmp.ne.s32.totalorder %s174, %s177
    %p186 = scmp.eq.s32.totalorder %s17, 1
    %p187 = por %p185, %p186
    %p188 = scmp.ne.s32.totalorder %s177, %s178
    %p189 = scmp.eq.s32.totalorder %s17, 0
    %p190 = por %p188, %p189
    %p191 = scmp.ne.s32.totalorder %s177, %s178
    %p192 = scmp.eq.s32.totalorder %s18, 1
    %p193 = por %p191, %p192
    %p195 = scmp.ne.s32.totalorder %s178, %s194
    %p196 = scmp.eq.s32.totalorder %s18, 0
    %p197 = por %p195, %p196
    %p198 = scmp.le.s32.totalorder 1, %s12
    %p199 = scmp.lt.s32.totalorder %s12, 3
    %p200 = pnand %p198, %p199
    %p201 = pneg %p200
    // Predicated region
    $region9: #{_lambda_.2} parent=5 // pred_check
      _
    $region10: #{_lambda_.2} parent=5 // pred_check_branch
      %203 = sbr.rel (%p200) target = $region12
    $region11: #{_lambda_.2} parent=5 // pred_region
      %s204 = ssub.s32 %s12, 1
      // Predicated region
      $region13: #{_lambda_.2} parent=11 // pred_check
        %p205 = pneg %p73
      $region14: #{_lambda_.2} parent=11 // pred_check_branch
        %207 = sbr.rel (%p205) target = $region16
      $region15: #{_lambda_.2} parent=11 // pred_region
        _
      $region16: #{_lambda_.2} parent=11 // pred_fallthru
        _
      // Predicated region
      $region17: #{_lambda_.2} parent=11 // pred_check
        %p208 = pneg %p94
      $region18: #{_lambda_.2} parent=11 // pred_check_branch
        %210 = sbr.rel (%p208) target = $region20
      $region19: #{_lambda_.2} parent=11 // pred_region
        _
      $region20: #{_lambda_.2} parent=11 // pred_fallthru
        _
      // Predicated region
      $region21: #{_lambda_.2} parent=11 // pred_check
        %p211 = pneg %p120
      $region22: #{_lambda_.2} parent=11 // pred_check_branch
        %213 = sbr.rel (%p211) target = $region24
      $region23: #{_lambda_.2} parent=11 // pred_region
        %s214 = smul.u32 2, %s21
        %p215 = scmp.lt.s32.totalorder %s214, 1
        %s216 = scalar_select %p215, %s214, 1
        %s217 = smul.addr %s216, 8
        %s218 = scalar_lea.vmem %s3, %s217
        %s219 = smul.u32 2, %s21
      $region24: #{_lambda_.2} parent=11 // pred_fallthru
        _
      // Predicated region
      $region25: #{_lambda_.2} parent=11 // pred_check
        %p220 = pneg %p141
      $region26: #{_lambda_.2} parent=11 // pred_check_branch
        %222 = sbr.rel (%p220) target = $region28
      $region27: #{_lambda_.2} parent=11 // pred_region
        _
      $region28: #{_lambda_.2} parent=11 // pred_fallthru
        _
      // Predicated region
      $region29: #{_lambda_.2} parent=11 // pred_check
        %p223 = pneg %p162
      $region30: #{_lambda_.2} parent=11 // pred_check_branch
        %225 = sbr.rel (%p223) target = $region32
      $region31: #{_lambda_.2} parent=11 // pred_region
        _
      $region32: #{_lambda_.2} parent=11 // pred_fallthru
        _
    $region12: #{_lambda_.2} parent=5 // pred_fallthru
      _
    %p226 = scmp.lt.s32.totalorder %s12, 2
    // Predicated region
    $region33: #{_lambda_.2} parent=5 // pred_check
      %p227 = pneg %p226
    $region34: #{_lambda_.2} parent=5 // pred_check_branch
      %229 = sbr.rel (%p227) target = $region36
    $region35: #{_lambda_.2} parent=5 // pred_region
      // Predicated region
      $region37: #{_lambda_.2} parent=35 // pred_check
        %p230 = pneg %p46
      $region38: #{_lambda_.2} parent=35 // pred_check_branch
        %232 = sbr.rel (%p230) target = $region40
      $region39: #{_lambda_.2} parent=35 // pred_region
        %s233 = smul.u32 2, %s19
        %p234 = scmp.lt.s32.totalorder %s20, 1
        %s235 = scalar_select %p234, %s20, 1
        %p236 = scmp.lt.s32.totalorder %s233, 1
        %s237 = scalar_select %p236, %s233, 1
        %s238 = smul.addr %s235, 2
        %s239 = sadd.s32 %s237, %s238
        %s240 = smul.addr %s239, 4
        %s241 = scalar_lea.vmem %s0, %s240
        %s242 = smul.u32 2, %s19
      $region40: #{_lambda_.2} parent=35 // pred_fallthru
        _
    $region36: #{_lambda_.2} parent=5 // pred_fallthru
      _
    %p243 = scmp.le.s32.totalorder 1, %s12
    %p244 = scmp.lt.s32.totalorder %s12, 3
    %p245 = pnand %p243, %p244
    %p246 = pneg %p245
    // Predicated region
    $region41: #{_lambda_.2} parent=5 // pred_check
      _
    $region42: #{_lambda_.2} parent=5 // pred_check_branch
      %248 = sbr.rel (%p245) target = $region44
    $region43: #{_lambda_.2} parent=5 // pred_region
      %s249 = ssub.s32 %s12, 1
      %s250 = smul.u32 2, %s21
      %p251 = scmp.lt.s32.totalorder %s22, 1
      %s252 = scalar_select %p251, %s22, 1
      %p253 = scmp.lt.s32.totalorder %s250, 1
      %s254 = scalar_select %p253, %s250, 1
      %s255 = smul.addr %s252, 2
      %s256 = sadd.s32 %s254, %s255
      %s257 = smul.addr %s256, 4
      %s258 = scalar_lea.vmem %s0, %s257
      %p259 = pneg %p52
      %p260 = pneg %p49
      %p261 = pneg %p73
      %p262 = pneg %p70
      %p263 = pneg %p94
      %p264 = pneg %p91
      %s265 = smul.u32 2, %s21
      %p266 = scmp.lt.s32.totalorder %s265, 1
      %s267 = scalar_select %p266, %s265, 1
      %s268 = smul.addr %s267, 8
      %s269 = scalar_lea.vmem %s3, %s268
      %p270 = pneg %p120
      %p271 = pneg %p117
      %p272 = pneg %p141
      %p273 = pneg %p138
      %p274 = pneg %p162
      %p275 = pneg %p159
      %p276 = pneg %p190
      %p277 = pneg %p187
      %s278 = smul.u32 2, %s21
      %p279 = scmp.lt.s32.totalorder %s22, 1
      %s280 = scalar_select %p279, %s22, 1
      %p281 = scmp.lt.s32.totalorder %s278, 1
      %s282 = scalar_select %p281, %s278, 1
      %s283 = smul.addr %s280, 2
      %s284 = sadd.s32 %s282, %s283
      %s285 = smul.addr %s284, 4
      %s286 = scalar_lea.vmem %s6, %s285
      %s287 = smul.u32 2, %s21
      %p288 = scmp.lt.s32.totalorder %s22, 1
      %s289 = scalar_select %p288, %s22, 1
      %p290 = scmp.lt.s32.totalorder %s287, 1
      %s291 = scalar_select %p290, %s287, 1
      %s292 = smul.addr %s289, 2
      %s293 = sadd.s32 %s291, %s292
      %s294 = smul.addr %s293, 4
      %s295 = scalar_lea.vmem %s0, %s294
      %s296 = smul.u32 2, %s21
      %s297 = smul.u32 2, %s21
      %p298 = scmp.lt.s32.totalorder %s297, 1
      %s299 = scalar_select %p298, %s297, 1
      %s300 = smul.addr %s299, 8
      %s301 = scalar_lea.vmem %s3, %s300
      %s302 = smul.u32 2, %s21
      %s303 = smul.u32 2, %s21
      %p304 = scmp.lt.s32.totalorder %s22, 1
      %s305 = scalar_select %p304, %s22, 1
      %p306 = scmp.lt.s32.totalorder %s303, 1
      %s307 = scalar_select %p306, %s303, 1
      %s308 = smul.addr %s305, 2
      %s309 = sadd.s32 %s307, %s308
      %s310 = smul.addr %s309, 4
      %s311 = scalar_lea.vmem %s6, %s310
      %s312 = smul.u32 2, %s21
      %v314 = vld [vmem:[%s295] sm:$0xf]
      %v315 = vld [vmem:[%s295 + $0x4] sm:$0xf]
      %v316 = vld [vmem:[%s1] sm:$0xf]
      %v317 = vld [vmem:[%s1 + $0x4] sm:$0xf]
      %v318 = vld [vmem:[%s1 + $0x8] sm:$0xf]
      %v319 = vld [vmem:[%s1 + $0xc] sm:$0xf]
      %v320 = vld [vmem:[%s1 + $0x10] sm:$0xf]
      %v321 = vld [vmem:[%s1 + $0x14] sm:$0xf]
      %v322 = vld [vmem:[%s1 + $0x18] sm:$0xf]
      %v323 = vld [vmem:[%s1 + $0x1c] sm:$0xf]
      %v324 = vld [vmem:[%s2] sm:$0x1]
      %v326 = vperm.slane %v324, 0
      %v330 = vunpack.c.l.b16 %v314
      %v331 = vunpack.c.l.b16 %v315
      %v332 = vpack.c.b16 %v331, %v330
      %v341 = vunpack.c.l.b16 %v316
      %v342 = vunpack.c.l.b16 %v317
      %v343 = vunpack.c.l.b16 %v318
      %v344 = vunpack.c.l.b16 %v319
      %v345 = vunpack.c.l.b16 %v320
      %v346 = vunpack.c.l.b16 %v321
      %v347 = vunpack.c.l.b16 %v322
      %v348 = vunpack.c.l.b16 %v323
      %v349 = vpack.c.b16 %v342, %v341
      %v350 = vpack.c.b16 %v344, %v343
      %v351 = vpack.c.b16 %v346, %v345
      %v352 = vpack.c.b16 %v348, %v347
      %vm357 = vcmask 523264
      %v359 = vsel %vm357, %v332, 0
      %361 = vmatpush.bf16.msra.mxu0 0
      %362 = vmatpush.bf16.msra.mxu0 0
      %363 = vmatpush.bf16.msra.mxu0 0
      %364 = vmatpush.bf16.msra.mxu0 0
      %365 = vmatpush.bf16.msra.mxu0 %v352
      %366 = vmatpush.bf16.msra.mxu0 %v351
      %367 = vmatpush.bf16.msra.mxu0 %v350
      %368 = vmatpush.bf16.msra.mxu0 %v349
      %369 = vmatmul.bf16.gmra.mxu0 %v359
      %v370 = vpop.f32.mrf.mxu0
      %v371 = vadd.f32 %v326, %v370
      %v372 = vpop.f32.mrf.mxu0
      %v373 = vadd.f32 %v326, %v372
      %374 = vdwg.mxu0
      %v375 = vld [vmem:[%s301] sm:$0xff]
      %v376 = vld [vmem:[%s301 + $0x8] sm:$0xff]
      %v377 = vadd.f32 %v371, %v375
      %v378 = vadd.f32 %v373, %v376
      %v379 = vld [vmem:[%s4] sm:$0x1]
      %v380 = vld [vmem:[%s5] sm:$0x1]
      %vm381 = vcmask 261120
      %v382 = vsel %vm381, %v377, 0.0
      %383 = vadd.xlane.f32.xlu0 %v382
      %v384 = vpop.xlane.xlu0 %383
      %v385 = vsel %vm381, %v378, 0.0
      %386 = vadd.xlane.f32.xlu0 %v385
      %v387 = vpop.xlane.xlu0 %386
      %v388 = vrcp.pop 32.0
      %v389 = vmul.f32 32.0, %v388
      %v390 = vsub.f32 1.0, %v389
      %v391 = vmul.f32 %v388, %v390
      %v392 = vadd.f32 %v388, %v391
      %vm393 = vweird.f32 %v388
      %v394 = vsel %vm393, %v388, %v392
      %v395 = vmul.f32 %v384, %v394
      %v396 = vmul.f32 %v387, %v394
      %v397 = vsub.f32 %v377, %v395
      %v398 = vsub.f32 %v378, %v396
      %v399 = vmul.f32 %v397, %v397
      %v400 = vmul.f32 %v398, %v398
      %v401 = vsel %vm381, %v399, 0.0
      %402 = vadd.xlane.f32.xlu0 %v401
      %v403 = vpop.xlane.xlu0 %402
      %v404 = vsel %vm381, %v400, 0.0
      %405 = vadd.xlane.f32.xlu0 %v404
      %v406 = vpop.xlane.xlu0 %405
      %v407 = vmul.f32 %v403, %v394
      %v408 = vmul.f32 %v406, %v394
      %v409 = vadd.f32 %v407, 1e-06
      %v410 = vadd.f32 %v408, 1e-06
      %v411 = vrsqrt.pop %v409
      %v412 = vmul.f32 %v411, %v409
      %v413 = vmul.f32 %v412, %v411
      %v414 = vmul.f32 0.5, %v413
      %v415 = vsub.f32 1.5, %v414
      %v416 = vmul.f32 %v411, %v415
      %vm417 = vweird.f32 %v409
      %vm418 = vweird.f32 %v411
      %vm419 = vmor %vm417, %vm418
      %v420 = vsel %vm419, %v411, %v416
      %v421 = vrsqrt.pop %v410
      %v422 = vmul.f32 %v421, %v410
      %v423 = vmul.f32 %v422, %v421
      %v424 = vmul.f32 0.5, %v423
      %v425 = vsub.f32 1.5, %v424
      %v426 = vmul.f32 %v421, %v425
      %vm427 = vweird.f32 %v410
      %vm428 = vweird.f32 %v421
      %vm429 = vmor %vm427, %vm428
      %v430 = vsel %vm429, %v421, %v426
      %v431 = vmul.f32 %v397, %v420
      %v432 = vmul.f32 %v398, %v430
      %v434 = vperm.slane %v379, 0
      %v436 = vmul.f32 %v431, %v434
      %v437 = vmul.f32 %v432, %v434
      %v439 = vperm.slane %v380, 0
      %v441 = vadd.f32 %v436, %v439
      %v442 = vadd.f32 %v437, %v439
      %v443 = vpack.c.bf16 %v441, %v441
      %v444 = vpack.c.bf16 %v442, %v442
      %vm445 = vcmask 257024
      %446 = vst.msk [vmem:[%s311] sm:$0xf] %vm445, %v443
      %447 = vst.msk [vmem:[%s311 + $0x4] sm:$0xf] %vm445, %v444
      %s448 = smul.u32 2, %s21
      %p449 = scmp.lt.s32.totalorder %s22, 1
      %s450 = scalar_select %p449, %s22, 1
      %p451 = scmp.lt.s32.totalorder %s448, 1
      %s452 = scalar_select %p451, %s448, 1
      %s453 = smul.addr %s450, 2
      %s454 = sadd.s32 %s452, %s453
      %s455 = smul.addr %s454, 4
      %s456 = scalar_lea.vmem %s6, %s455
      // Predicated region
      $region45: #{_lambda_.2} parent=43 // pred_check
        %p457 = pneg %p187
      $region46: #{_lambda_.2} parent=43 // pred_check_branch
        %459 = sbr.rel (%p457) target = $region48
      $region47: #{_lambda_.2} parent=43 // pred_region
        %s460 = smul.u32 2, %s21
      $region48: #{_lambda_.2} parent=43 // pred_fallthru
        _
    $region44: #{_lambda_.2} parent=5 // pred_fallthru
      _
    %p461 = scmp.le.s32.totalorder 2, %s12
    // Predicated region
    $region49: #{_lambda_.2} parent=5 // pred_check
      %p462 = pneg %p461
    $region50: #{_lambda_.2} parent=5 // pred_check_branch
      %464 = sbr.rel (%p462) target = $region52
    $region51: #{_lambda_.2} parent=5 // pred_region
      %s465 = ssub.s32 %s12, 2
      // Predicated region
      $region53: #{_lambda_.2} parent=51 // pred_check
        %p466 = pneg %p193
      $region54: #{_lambda_.2} parent=51 // pred_check_branch
        %468 = sbr.rel (%p466) target = $region56
      $region55: #{_lambda_.2} parent=51 // pred_region
        %s469 = smul.u32 2, %s23
        %p470 = scmp.lt.s32.totalorder %s24, 1
        %s471 = scalar_select %p470, %s24, 1
        %p472 = scmp.lt.s32.totalorder %s469, 1
        %s473 = scalar_select %p472, %s469, 1
        %s474 = smul.addr %s471, 2
        %s475 = sadd.s32 %s473, %s474
        %s476 = smul.addr %s475, 4
        %s477 = scalar_lea.vmem %s6, %s476
      $region56: #{_lambda_.2} parent=51 // pred_fallthru
        _
    $region52: #{_lambda_.2} parent=5 // pred_fallthru
      _
  $region6: #{_lambda_.2} parent=0 // loop_footer
    %s16 = sadd.s32 1, %s12
  $region7: #{_lambda_.2} parent=0 // loop_footer_branch
    %11 = sbr.rel target = $region3
  $region8: #{_lambda_.2} parent=0 // loop_exit
    _

// kernel: _lambda_.3
$region0: #{_lambda_.3}
  #allocation0 [shape = 'u32[]', space=smem, size = 0x4, offset = 0x4, fixed_abs, tag = 'smem constant byte address 0x4 - core index']
  #allocation1 [shape = 'u32[72,128]{1,0:T(1,128)}', space=vmem, size = 0x9000, scoped, tag = 'internal scratch']
  %s0 = inlined_call_operand.vmem [shape: f32[32,32], index: 0, kind: input, shape index: {}]
  %s1 = inlined_call_operand.vmem [shape: f32[1,32], index: 1, kind: input, shape index: {}]
  %s2 = inlined_call_operand.vmem [shape: f32[1,32], index: 2, kind: input, shape index: {}]
  %s3 = inlined_call_operand.vmem [shape: bf16[32,128], index: 3, kind: input, shape index: {}]
  %s4 = inlined_call_operand.vmem [shape: f32[1,128], index: 4, kind: input, shape index: {}]
  %s5 = inlined_call_operand.vmem [shape: bf16[128,32], index: 5, kind: input, shape index: {}]
  %s6 = inlined_call_operand.vmem [shape: f32[1,32], index: 6, kind: input, shape index: {}]
  %s7 = inlined_call_operand.vmem [shape: f32[1,32], index: 7, kind: input, shape index: {}]
  %s8 = inlined_call_operand.vmem [shape: f32[1,32], index: 8, kind: input, shape index: {}]
  %s9 = inlined_call_operand.vmem [shape: f32[32,32], index: 9, kind: output, shape index: {}]
  %s10 = sld [smem:[#allocation0]]
  $region46: #{_lambda_.3} parent=0
    _
  %s12 = ssub.s32 1, %s10
  %s13 = scalar_select 0, %s12, %s10
  // Predicated region
  $region2: #{_lambda_.3} parent=0 // pred_check
    _
  $region3: #{_lambda_.3} parent=0 // pred_check_branch
    %15 = sbr.rel (0) target = $region5
  $region4: #{_lambda_.3} parent=0 // pred_region
    _
  $region5: #{_lambda_.3} parent=0 // pred_fallthru
    _
  // Predicated region
  $region6: #{_lambda_.3} parent=0 // pred_check
    _
  $region7: #{_lambda_.3} parent=0 // pred_check_branch
    %17 = sbr.rel (0) target = $region9
  $region8: #{_lambda_.3} parent=0 // pred_region
    _
  $region9: #{_lambda_.3} parent=0 // pred_fallthru
    _
  // Predicated region
  $region10: #{_lambda_.3} parent=0 // pred_check
    _
  $region11: #{_lambda_.3} parent=0 // pred_check_branch
    %19 = sbr.rel (0) target = $region13
  $region12: #{_lambda_.3} parent=0 // pred_region
    _
  $region13: #{_lambda_.3} parent=0 // pred_fallthru
    _
  // Predicated region
  $region14: #{_lambda_.3} parent=0 // pred_check
    _
  $region15: #{_lambda_.3} parent=0 // pred_check_branch
    %21 = sbr.rel (0) target = $region17
  $region16: #{_lambda_.3} parent=0 // pred_region
    _
  $region17: #{_lambda_.3} parent=0 // pred_fallthru
    _
  // Predicated region
  $region18: #{_lambda_.3} parent=0 // pred_check
    _
  $region19: #{_lambda_.3} parent=0 // pred_check_branch
    %23 = sbr.rel (0) target = $region21
  $region20: #{_lambda_.3} parent=0 // pred_region
    _
  $region21: #{_lambda_.3} parent=0 // pred_fallthru
    _
  // Predicated region
  $region22: #{_lambda_.3} parent=0 // pred_check
    _
  $region23: #{_lambda_.3} parent=0 // pred_check_branch
    %25 = sbr.rel (0) target = $region25
  $region24: #{_lambda_.3} parent=0 // pred_region
    _
  $region25: #{_lambda_.3} parent=0 // pred_fallthru
    _
  // Predicated region
  $region26: #{_lambda_.3} parent=0 // pred_check
    _
  $region27: #{_lambda_.3} parent=0 // pred_check_branch
    %27 = sbr.rel (0) target = $region29
  $region28: #{_lambda_.3} parent=0 // pred_region
    _
  $region29: #{_lambda_.3} parent=0 // pred_fallthru
    _
  // Predicated region
  $region30: #{_lambda_.3} parent=0 // pred_check
    _
  $region31: #{_lambda_.3} parent=0 // pred_check_branch
    %29 = sbr.rel (0) target = $region33
  $region32: #{_lambda_.3} parent=0 // pred_region
    _
  $region33: #{_lambda_.3} parent=0 // pred_fallthru
    _
  // Predicated region
  $region34: #{_lambda_.3} parent=0 // pred_check
    _
  $region35: #{_lambda_.3} parent=0 // pred_check_branch
    %31 = sbr.rel (0) target = $region37
  $region36: #{_lambda_.3} parent=0 // pred_region
    _
  $region37: #{_lambda_.3} parent=0 // pred_fallthru
    _
  %v33 = vld [vmem:[%s0] sm:$0xff]
  %v34 = vld [vmem:[%s0 + $0x8] sm:$0xff]
  %v35 = vld [vmem:[%s0 + $0x10] sm:$0xff]
  %v36 = vld [vmem:[%s0 + $0x18] sm:$0xff]
  %v37 = vld [vmem:[%s1] sm:$0x1]
  %v38 = vld [vmem:[%s2] sm:$0x1]
  %vm39 = vcmask 261120
  %v40 = vsel %vm39, %v33, 0.0
  %41 = vadd.xlane.f32.xlu0 %v40
  %v42 = vpop.xlane.xlu0 %41
  %v43 = vsel %vm39, %v34, 0.0
  %44 = vadd.xlane.f32.xlu0 %v43
  %v45 = vpop.xlane.xlu0 %44
  %v46 = vsel %vm39, %v35, 0.0
  %47 = vadd.xlane.f32.xlu0 %v46
  %v48 = vpop.xlane.xlu0 %47
  %v49 = vsel %vm39, %v36, 0.0
  %50 = vadd.xlane.f32.xlu0 %v49
  %v51 = vpop.xlane.xlu0 %50
  %v52 = vrcp.pop 32.0
  %v53 = vmul.f32 32.0, %v52
  %v54 = vsub.f32 1.0, %v53
  %v55 = vmul.f32 %v52, %v54
  %v56 = vadd.f32 %v52, %v55
  %vm57 = vweird.f32 %v52
  %v58 = vsel %vm57, %v52, %v56
  %v59 = vmul.f32 %v42, %v58
  %v60 = vmul.f32 %v45, %v58
  %v61 = vmul.f32 %v48, %v58
  %v62 = vmul.f32 %v51, %v58
  %v63 = vsub.f32 %v33, %v59
  %v64 = vsub.f32 %v34, %v60
  %v65 = vsub.f32 %v35, %v61
  %v66 = vsub.f32 %v36, %v62
  %v67 = vmul.f32 %v63, %v63
  %v68 = vmul.f32 %v64, %v64
  %v69 = vmul.f32 %v65, %v65
  %v70 = vmul.f32 %v66, %v66
  %v71 = vsel %vm39, %v67, 0.0
  %72 = vadd.xlane.f32.xlu0 %v71
  %v73 = vpop.xlane.xlu0 %72
  %v74 = vsel %vm39, %v68, 0.0
  %75 = vadd.xlane.f32.xlu0 %v74
  %v76 = vpop.xlane.xlu0 %75
  %v77 = vsel %vm39, %v69, 0.0
  %78 = vadd.xlane.f32.xlu0 %v77
  %v79 = vpop.xlane.xlu0 %78
  %v80 = vsel %vm39, %v70, 0.0
  %81 = vadd.xlane.f32.xlu0 %v80
  %v82 = vpop.xlane.xlu0 %81
  %v83 = vmul.f32 %v73, %v58
  %v84 = vmul.f32 %v76, %v58
  %v85 = vmul.f32 %v79, %v58
  %v86 = vmul.f32 %v82, %v58
  %v87 = vadd.f32 %v83, 1e-06
  %v88 = vadd.f32 %v84, 1e-06
  %v89 = vadd.f32 %v85, 1e-06
  %v90 = vadd.f32 %v86, 1e-06
  %v91 = vrsqrt.pop %v87
  %v92 = vmul.f32 %v91, %v87
  %v93 = vmul.f32 %v92, %v91
  %v94 = vmul.f32 0.5, %v93
  %v95 = vsub.f32 1.5, %v94
  %v96 = vmul.f32 %v91, %v95
  %vm97 = vweird.f32 %v87
  %vm98 = vweird.f32 %v91
  %vm99 = vmor %vm97, %vm98
  %v100 = vsel %vm99, %v91, %v96
  %v101 = vrsqrt.pop %v88
  %v102 = vmul.f32 %v101, %v88
  %v103 = vmul.f32 %v102, %v101
  %v104 = vmul.f32 0.5, %v103
  %v105 = vsub.f32 1.5, %v104
  %v106 = vmul.f32 %v101, %v105
  %vm107 = vweird.f32 %v88
  %vm108 = vweird.f32 %v101
  %vm109 = vmor %vm107, %vm108
  %v110 = vsel %vm109, %v101, %v106
  %v111 = vrsqrt.pop %v89
  %v112 = vmul.f32 %v111, %v89
  %v113 = vmul.f32 %v112, %v111
  %v114 = vmul.f32 0.5, %v113
  %v115 = vsub.f32 1.5, %v114
  %v116 = vmul.f32 %v111, %v115
  %vm117 = vweird.f32 %v89
  %vm118 = vweird.f32 %v111
  %vm119 = vmor %vm117, %vm118
  %v120 = vsel %vm119, %v111, %v116
  %v121 = vrsqrt.pop %v90
  %v122 = vmul.f32 %v121, %v90
  %v123 = vmul.f32 %v122, %v121
  %v124 = vmul.f32 0.5, %v123
  %v125 = vsub.f32 1.5, %v124
  %v126 = vmul.f32 %v121, %v125
  %vm127 = vweird.f32 %v90
  %vm128 = vweird.f32 %v121
  %vm129 = vmor %vm127, %vm128
  %v130 = vsel %vm129, %v121, %v126
  %v131 = vmul.f32 %v63, %v100
  %v132 = vmul.f32 %v64, %v110
  %v133 = vmul.f32 %v65, %v120
  %v134 = vmul.f32 %v66, %v130
  %v136 = vperm.slane %v37, 0
  %v138 = vmul.f32 %v131, %v136
  %v139 = vmul.f32 %v132, %v136
  %v140 = vmul.f32 %v133, %v136
  %v141 = vmul.f32 %v134, %v136
  %v143 = vperm.slane %v38, 0
  %v145 = vadd.f32 %v138, %v143
  %v146 = vadd.f32 %v139, %v143
  %v147 = vadd.f32 %v140, %v143
  %v148 = vadd.f32 %v141, %v143
  %v149 = vpack.c.bf16 %v146, %v145
  %v150 = vpack.c.bf16 %v148, %v147
  %v151 = vld [vmem:[%s3] sm:$0xf]
  %v152 = vld [vmem:[%s3 + $0x4] sm:$0xf]
  %v153 = vld [vmem:[%s3 + $0x8] sm:$0xf]
  %v154 = vld [vmem:[%s3 + $0xc] sm:$0xf]
  %v155 = vld [vmem:[%s4] sm:$0x1]
  %v157 = vperm.slane %v155, 0
  %v163 = vunpack.c.l.b16 %v151
  %v164 = vunpack.c.l.b16 %v152
  %v165 = vunpack.c.l.b16 %v153
  %v166 = vunpack.c.l.b16 %v154
  %v167 = vpack.c.b16 %v164, %v163
  %v168 = vpack.c.b16 %v166, %v165
  %v172 = vsel %vm39, %v149, 0
  %v175 = vsel %vm39, %v150, 0
  %177 = vmatpush.bf16.msra.mxu0 0
  %178 = vmatpush.bf16.msra.mxu0 0
  %179 = vmatpush.bf16.msra.mxu0 0
  %180 = vmatpush.bf16.msra.mxu0 0
  %181 = vmatpush.bf16.msra.mxu0 0
  %182 = vmatpush.bf16.msra.mxu0 0
  %183 = vmatpush.bf16.msra.mxu0 %v168
  %184 = vmatpush.bf16.msra.mxu0 %v167
  %185 = vmatmul.bf16.gmra.mxu0 %v172
  %v186 = vpop.f32.mrf.mxu0
  %v187 = vadd.f32 %v157, %v186
  %v188 = vpop.f32.mrf.mxu0
  %v189 = vadd.f32 %v157, %v188
  %190 = vmatmul.bf16.gmra.mxu0 %v175
  %v191 = vpop.f32.mrf.mxu0
  %v192 = vadd.f32 %v157, %v191
  %v193 = vpop.f32.mrf.mxu0
  %v194 = vadd.f32 %v157, %v193
  %195 = vdwg.mxu0
  %v196 = vmul.f32 %v187, 0.5
  %v197 = vmul.f32 %v189, 0.5
  %v198 = vmul.f32 %v192, 0.5
  %v199 = vmul.f32 %v194, 0.5
  %v200 = vmul.f32 %v187, 0.70710677
  %v201 = vmul.f32 %v189, 0.70710677
  %v202 = vmul.f32 %v192, 0.70710677
  %v203 = vmul.f32 %v194, 0.70710677
  %v204 = vmul.f32 %v200, %v200
  %v205 = vmin.f32 16.0, %v204
  %v206 = vmul.f32 %v205, 2.1237322e-06
  %v207 = vadd.f32 %v206, 0.00028619796
  %v208 = vmul.f32 %v205, %v207
  %v209 = vadd.f32 %v208, 0.0036580483
  %v210 = vmul.f32 %v205, %v209
  %v211 = vadd.f32 %v210, 0.05243302
  %v212 = vmul.f32 %v205, %v211
  %v213 = vadd.f32 %v212, 0.18741608
  %v214 = vmul.f32 %v205, %v213
  %v215 = vadd.f32 %v214, 1.1283791
  %v216 = vmul.f32 %v200, %v215
  %v217 = vmul.f32 %v205, 3.8918573e-05
  %v218 = vadd.f32 %v217, 0.001143296
  %v219 = vmul.f32 %v205, %v218
  %v220 = vadd.f32 %v219, 0.014752088
  %v221 = vmul.f32 %v205, %v220
  %v222 = vadd.f32 %v221, 0.112945676
  %v223 = vmul.f32 %v205, %v222
  %v224 = vadd.f32 %v223, 0.4994258
  %v225 = vmul.f32 %v205, %v224
  %v226 = vadd.f32 %v225, 1.0
  %v227 = vrcp.pop %v226
  %v228 = vmul.f32 %v226, %v227
  %v229 = vsub.f32 1.0, %v228
  %v230 = vmul.f32 %v227, %v229
  %v231 = vadd.f32 %v227, %v230
  %vm232 = vweird.f32 %v226
  %vm233 = vweird.f32 %v227
  %vm234 = vmor %vm232, %vm233
  %v235 = vsel %vm234, %v227, %v231
  %v236 = vand.u32 2147483647, %v226
  %vm237 = vcmp.eq.f32.partialorder %v236, 8.507059e+37
  %v238 = vand.u32 %v226, 2147483648
  %v239 = vor.u32 1.1754944e-38, %v238
  %v240 = vsel %vm237, %v239, %v235
  %v241 = vmul.f32 %v216, %v240
  %v242 = vmin.f32 %v241, 1.0
  %v243 = vmax.f32 %v242, -1.0
  %v244 = vmul.f32 %v201, %v201
  %v245 = vmin.f32 16.0, %v244
  %v246 = vmul.f32 %v245, 2.1237322e-06
  %v247 = vadd.f32 %v246, 0.00028619796
  %v248 = vmul.f32 %v245, %v247
  %v249 = vadd.f32 %v248, 0.0036580483
  %v250 = vmul.f32 %v245, %v249
  %v251 = vadd.f32 %v250, 0.05243302
  %v252 = vmul.f32 %v245, %v251
  %v253 = vadd.f32 %v252, 0.18741608
  %v254 = vmul.f32 %v245, %v253
  %v255 = vadd.f32 %v254, 1.1283791
  %v256 = vmul.f32 %v201, %v255
  %v257 = vmul.f32 %v245, 3.8918573e-05
  %v258 = vadd.f32 %v257, 0.001143296
  %v259 = vmul.f32 %v245, %v258
  %v260 = vadd.f32 %v259, 0.014752088
  %v261 = vmul.f32 %v245, %v260
  %v262 = vadd.f32 %v261, 0.112945676
  %v263 = vmul.f32 %v245, %v262
  %v264 = vadd.f32 %v263, 0.4994258
  %v265 = vmul.f32 %v245, %v264
  %v266 = vadd.f32 %v265, 1.0
  %v267 = vrcp.pop %v266
  %v268 = vmul.f32 %v266, %v267
  %v269 = vsub.f32 1.0, %v268
  %v270 = vmul.f32 %v267, %v269
  %v271 = vadd.f32 %v267, %v270
  %vm272 = vweird.f32 %v266
  %vm273 = vweird.f32 %v267
  %vm274 = vmor %vm272, %vm273
  %v275 = vsel %vm274, %v267, %v271
  %v276 = vand.u32 2147483647, %v266
  %vm277 = vcmp.eq.f32.partialorder %v276, 8.507059e+37
  %v278 = vand.u32 %v266, 2147483648
  %v279 = vor.u32 1.1754944e-38, %v278
  %v280 = vsel %vm277, %v279, %v275
  %v281 = vmul.f32 %v256, %v280
  %v282 = vmin.f32 %v281, 1.0
  %v283 = vmax.f32 %v282, -1.0
  %v284 = vmul.f32 %v202, %v202
  %v285 = vmin.f32 16.0, %v284
  %v286 = vmul.f32 %v285, 2.1237322e-06
  %v287 = vadd.f32 %v286, 0.00028619796
  %v288 = vmul.f32 %v285, %v287
  %v289 = vadd.f32 %v288, 0.0036580483
  %v290 = vmul.f32 %v285, %v289
  %v291 = vadd.f32 %v290, 0.05243302
  %v292 = vmul.f32 %v285, %v291
  %v293 = vadd.f32 %v292, 0.18741608
  %v294 = vmul.f32 %v285, %v293
  %v295 = vadd.f32 %v294, 1.1283791
  %v296 = vmul.f32 %v202, %v295
  %v297 = vmul.f32 %v285, 3.8918573e-05
  %v298 = vadd.f32 %v297, 0.001143296
  %v299 = vmul.f32 %v285, %v298
  %v300 = vadd.f32 %v299, 0.014752088
  %v301 = vmul.f32 %v285, %v300
  %v302 = vadd.f32 %v301, 0.112945676
  %v303 = vmul.f32 %v285, %v302
  %v304 = vadd.f32 %v303, 0.4994258
  %v305 = vmul.f32 %v285, %v304
  %v306 = vadd.f32 %v305, 1.0
  %v307 = vrcp.pop %v306
  %v308 = vmul.f32 %v306, %v307
  %v309 = vsub.f32 1.0, %v308
  %v310 = vmul.f32 %v307, %v309
  %v311 = vadd.f32 %v307, %v310
  %vm312 = vweird.f32 %v306
  %vm313 = vweird.f32 %v307
  %vm314 = vmor %vm312, %vm313
  %v315 = vsel %vm314, %v307, %v311
  %v316 = vand.u32 2147483647, %v306
  %vm317 = vcmp.eq.f32.partialorder %v316, 8.507059e+37
  %v318 = vand.u32 %v306, 2147483648
  %v319 = vor.u32 1.1754944e-38, %v318
  %v320 = vsel %vm317, %v319, %v315
  %v321 = vmul.f32 %v296, %v320
  %v322 = vmin.f32 %v321, 1.0
  %v323 = vmax.f32 %v322, -1.0
  %v324 = vmul.f32 %v203, %v203
  %v325 = vmin.f32 16.0, %v324
  %v326 = vmul.f32 %v325, 2.1237322e-06
  %v327 = vadd.f32 %v326, 0.00028619796
  %v328 = vmul.f32 %v325, %v327
  %v329 = vadd.f32 %v328, 0.0036580483
  %v330 = vmul.f32 %v325, %v329
  %v331 = vadd.f32 %v330, 0.05243302
  %v332 = vmul.f32 %v325, %v331
  %v333 = vadd.f32 %v332, 0.18741608
  %v334 = vmul.f32 %v325, %v333
  %v335 = vadd.f32 %v334, 1.1283791
  %v336 = vmul.f32 %v203, %v335
  %v337 = vmul.f32 %v325, 3.8918573e-05
  %v338 = vadd.f32 %v337, 0.001143296
  %v339 = vmul.f32 %v325, %v338
  %v340 = vadd.f32 %v339, 0.014752088
  %v341 = vmul.f32 %v325, %v340
  %v342 = vadd.f32 %v341, 0.112945676
  %v343 = vmul.f32 %v325, %v342
  %v344 = vadd.f32 %v343, 0.4994258
  %v345 = vmul.f32 %v325, %v344
  %v346 = vadd.f32 %v345, 1.0
  %v347 = vrcp.pop %v346
  %v348 = vmul.f32 %v346, %v347
  %v349 = vsub.f32 1.0, %v348
  %v350 = vmul.f32 %v347, %v349
  %v351 = vadd.f32 %v347, %v350
  %vm352 = vweird.f32 %v346
  %vm353 = vweird.f32 %v347
  %vm354 = vmor %vm352, %vm353
  %v355 = vsel %vm354, %v347, %v351
  %v356 = vand.u32 2147483647, %v346
  %vm357 = vcmp.eq.f32.partialorder %v356, 8.507059e+37
  %v358 = vand.u32 %v346, 2147483648
  %v359 = vor.u32 1.1754944e-38, %v358
  %v360 = vsel %vm357, %v359, %v355
  %v361 = vmul.f32 %v336, %v360
  %v362 = vmin.f32 %v361, 1.0
  %v363 = vmax.f32 %v362, -1.0
  %v364 = vadd.f32 %v243, 1.0
  %v365 = vadd.f32 %v283, 1.0
  %v366 = vadd.f32 %v323, 1.0
  %v367 = vadd.f32 %v363, 1.0
  %v368 = vmul.f32 %v196, %v364
  %v369 = vmul.f32 %v197, %v365
  %v370 = vmul.f32 %v198, %v366
  %v371 = vmul.f32 %v199, %v367
  %v372 = vpack.c.bf16 %v369, %v368
  %v373 = vpack.c.bf16 %v371, %v370
  %v374 = vld [vmem:[%s5] sm:$0xf]
  %v375 = vld [vmem:[%s5 + $0x4] sm:$0xf]
  %v376 = vld [vmem:[%s5 + $0x8] sm:$0xf]
  %v377 = vld [vmem:[%s5 + $0xc] sm:$0xf]
  %v378 = vld [vmem:[%s5 + $0x10] sm:$0xf]
  %v379 = vld [vmem:[%s5 + $0x14] sm:$0xf]
  %v380 = vld [vmem:[%s5 + $0x18] sm:$0xf]
  %v381 = vld [vmem:[%s5 + $0x1c] sm:$0xf]
  %v382 = vld [vmem:[%s5 + $0x20] sm:$0xf]
  %v383 = vld [vmem:[%s5 + $0x24] sm:$0xf]
  %v384 = vld [vmem:[%s5 + $0x28] sm:$0xf]
  %v385 = vld [vmem:[%s5 + $0x2c] sm:$0xf]
  %v386 = vld [vmem:[%s5 + $0x30] sm:$0xf]
  %v387 = vld [vmem:[%s5 + $0x34] sm:$0xf]
  %v388 = vld [vmem:[%s5 + $0x38] sm:$0xf]
  %v389 = vld [vmem:[%s5 + $0x3c] sm:$0xf]
  %v390 = vld [vmem:[%s6] sm:$0x1]
  %v392 = vperm.slane %v390, 0
  %v410 = vunpack.c.l.b16 %v374
  %v411 = vunpack.c.l.b16 %v375
  %v412 = vunpack.c.l.b16 %v376
  %v413 = vunpack.c.l.b16 %v377
  %v414 = vunpack.c.l.b16 %v378
  %v415 = vunpack.c.l.b16 %v379
  %v416 = vunpack.c.l.b16 %v380
  %v417 = vunpack.c.l.b16 %v381
  %v418 = vunpack.c.l.b16 %v382
  %v419 = vunpack.c.l.b16 %v383
  %v420 = vunpack.c.l.b16 %v384
  %v421 = vunpack.c.l.b16 %v385
  %v422 = vunpack.c.l.b16 %v386
  %v423 = vunpack.c.l.b16 %v387
  %v424 = vunpack.c.l.b16 %v388
  %v425 = vunpack.c.l.b16 %v389
  %v426 = vpack.c.b16 %v411, %v410
  %v427 = vpack.c.b16 %v413, %v412
  %v428 = vpack.c.b16 %v415, %v414
  %v429 = vpack.c.b16 %v417, %v416
  %v430 = vpack.c.b16 %v419, %v418
  %v431 = vpack.c.b16 %v421, %v420
  %v432 = vpack.c.b16 %v423, %v422
  %v433 = vpack.c.b16 %v425, %v424
  %442 = vmatpush.bf16.msra.mxu0 %v433
  %443 = vmatpush.bf16.msra.mxu0 %v432
  %444 = vmatpush.bf16.msra.mxu0 %v431
  %445 = vmatpush.bf16.msra.mxu0 %v430
  %446 = vmatpush.bf16.msra.mxu0 %v429
  %447 = vmatpush.bf16.msra.mxu0 %v428
  %448 = vmatpush.bf16.msra.mxu0 %v427
  %449 = vmatpush.bf16.msra.mxu0 %v426
  %450 = vmatmul.bf16.gmra.mxu0 %v372
  %v451 = vpop.f32.mrf.mxu0
  %v452 = vadd.f32 %v392, %v451
  %v453 = vpop.f32.mrf.mxu0
  %v454 = vadd.f32 %v392, %v453
  %455 = vmatmul.bf16.gmra.mxu0 %v373
  %v456 = vpop.f32.mrf.mxu0
  %v457 = vadd.f32 %v392, %v456
  %v458 = vpop.f32.mrf.mxu0
  %v459 = vadd.f32 %v392, %v458
  %460 = vdwg.mxu0
  %v461 = vld [vmem:[%s7] sm:$0x1]
  %v462 = vld [vmem:[%s8] sm:$0x1]
  %v463 = vsel %vm39, %v452, 0.0
  %464 = vadd.xlane.f32.xlu0 %v463
  %v465 = vpop.xlane.xlu0 %464
  %v466 = vsel %vm39, %v454, 0.0
  %467 = vadd.xlane.f32.xlu0 %v466
  %v468 = vpop.xlane.xlu0 %467
  %v469 = vsel %vm39, %v457, 0.0
  %470 = vadd.xlane.f32.xlu0 %v469
  %v471 = vpop.xlane.xlu0 %470
  %v472 = vsel %vm39, %v459, 0.0
  %473 = vadd.xlane.f32.xlu0 %v472
  %v474 = vpop.xlane.xlu0 %473
  %v475 = vmul.f32 %v465, %v58
  %v476 = vmul.f32 %v468, %v58
  %v477 = vmul.f32 %v471, %v58
  %v478 = vmul.f32 %v474, %v58
  %v479 = vsub.f32 %v452, %v475
  %v480 = vsub.f32 %v454, %v476
  %v481 = vsub.f32 %v457, %v477
  %v482 = vsub.f32 %v459, %v478
  %v483 = vmul.f32 %v479, %v479
  %v484 = vmul.f32 %v480, %v480
  %v485 = vmul.f32 %v481, %v481
  %v486 = vmul.f32 %v482, %v482
  %v487 = vsel %vm39, %v483, 0.0
  %488 = vadd.xlane.f32.xlu0 %v487
  %v489 = vpop.xlane.xlu0 %488
  %v490 = vsel %vm39, %v484, 0.0
  %491 = vadd.xlane.f32.xlu0 %v490
  %v492 = vpop.xlane.xlu0 %491
  %v493 = vsel %vm39, %v485, 0.0
  %494 = vadd.xlane.f32.xlu0 %v493
  %v495 = vpop.xlane.xlu0 %494
  %v496 = vsel %vm39, %v486, 0.0
  %497 = vadd.xlane.f32.xlu0 %v496
  %v498 = vpop.xlane.xlu0 %497
  %v499 = vmul.f32 %v489, %v58
  %v500 = vmul.f32 %v492, %v58
  %v501 = vmul.f32 %v495, %v58
  %v502 = vmul.f32 %v498, %v58
  %v503 = vadd.f32 %v499, 2.5e-07
  %v504 = vadd.f32 %v500, 2.5e-07
  %v505 = vadd.f32 %v501, 2.5e-07
  %v506 = vadd.f32 %v502, 2.5e-07
  %v507 = vrsqrt.pop %v503
  %v508 = vmul.f32 %v507, %v503
  %v509 = vmul.f32 %v508, %v507
  %v510 = vmul.f32 0.5, %v509
  %v511 = vsub.f32 1.5, %v510
  %v512 = vmul.f32 %v507, %v511
  %vm513 = vweird.f32 %v503
  %vm514 = vweird.f32 %v507
  %vm515 = vmor %vm513, %vm514
  %v516 = vsel %vm515, %v507, %v512
  %v517 = vrsqrt.pop %v504
  %v518 = vmul.f32 %v517, %v504
  %v519 = vmul.f32 %v518, %v517
  %v520 = vmul.f32 0.5, %v519
  %v521 = vsub.f32 1.5, %v520
  %v522 = vmul.f32 %v517, %v521
  %vm523 = vweird.f32 %v504
  %vm524 = vweird.f32 %v517
  %vm525 = vmor %vm523, %vm524
  %v526 = vsel %vm525, %v517, %v522
  %v527 = vrsqrt.pop %v505
  %v528 = vmul.f32 %v527, %v505
  %v529 = vmul.f32 %v528, %v527
  %v530 = vmul.f32 0.5, %v529
  %v531 = vsub.f32 1.5, %v530
  %v532 = vmul.f32 %v527, %v531
  %vm533 = vweird.f32 %v505
  %vm534 = vweird.f32 %v527
  %vm535 = vmor %vm533, %vm534
  %v536 = vsel %vm535, %v527, %v532
  %v537 = vrsqrt.pop %v506
  %v538 = vmul.f32 %v537, %v506
  %v539 = vmul.f32 %v538, %v537
  %v540 = vmul.f32 0.5, %v539
  %v541 = vsub.f32 1.5, %v540
  %v542 = vmul.f32 %v537, %v541
  %vm543 = vweird.f32 %v506
  %vm544 = vweird.f32 %v537
  %vm545 = vmor %vm543, %vm544
  %v546 = vsel %vm545, %v537, %v542
  %v547 = vmul.f32 %v479, %v516
  %v548 = vmul.f32 %v480, %v526
  %v549 = vmul.f32 %v481, %v536
  %v550 = vmul.f32 %v482, %v546
  %v552 = vperm.slane %v461, 0
  %v554 = vmul.f32 %v547, %v552
  %v555 = vmul.f32 %v548, %v552
  %v556 = vmul.f32 %v549, %v552
  %v557 = vmul.f32 %v550, %v552
  %v559 = vperm.slane %v462, 0
  %v561 = vadd.f32 %v554, %v559
  %v562 = vadd.f32 %v555, %v559
  %v563 = vadd.f32 %v556, %v559
  %v564 = vadd.f32 %v557, %v559
  %565 = vst.msk [vmem:[%s9] sm:$0xff] %vm39, %v561
  %566 = vst.msk [vmem:[%s9 + $0x8] sm:$0xff] %vm39, %v562
  %567 = vst.msk [vmem:[%s9 + $0x10] sm:$0xff] %vm39, %v563
  %568 = vst.msk [vmem:[%s9 + $0x18] sm:$0xff] %vm39, %v564
  // Predicated region
  $region38: #{_lambda_.3} parent=0 // pred_check
    _
  $region39: #{_lambda_.3} parent=0 // pred_check_branch
    %570 = sbr.rel (0) target = $region41
  $region40: #{_lambda_.3} parent=0 // pred_region
    _
  $region41: #{_lambda_.3} parent=0 // pred_fallthru
    _
  // Predicated region
  $region42: #{_lambda_.3} parent=0 // pred_check
    _
  $region43: #{_lambda_.3} parent=0 // pred_check_branch
    %572 = sbr.rel (0) target = $region45
  $region44: #{_lambda_.3} parent=0 // pred_region
    _
  $region45: #{_lambda_.3} parent=0 // pred_fallthru
    _

</llo_original>
